<compile_context>
chip_gen: v7x
topology: tpu7x:2x2x1
jax: 0.10.0
libtpu: 0.0.40
codegen_flags: <defaults>
</compile_context>

<pallas_src>
import jax
import jax.numpy as jnp
from jax.experimental import pallas as pl
from jax.experimental.pallas import tpu as pltpu

OUT_PAD = 128  # lane-dense padded output width


def _fc_model_kernel(s_ref, c_ref, ws_ref, wc_ref, b_ref, o_ref):
    # s_ref : (bm, seq_s*d)          flattened S block
    # c_ref : (bm, k*seq_c*d)        flattened C block
    # ws_ref: (seq_s*d, OUT_PAD)     seq-replicated, 1/seq-scaled, zero-padded W rows for S
    # wc_ref: (k*seq_c*d, OUT_PAD)   same for C
    # b_ref : (1, OUT_PAD)           zero-padded bias
    # o_ref : (bm, OUT_PAD)
    acc = jnp.dot(s_ref[...], ws_ref[...], preferred_element_type=jnp.float32)
    acc = acc + jnp.dot(c_ref[...], wc_ref[...], preferred_element_type=jnp.float32)
    o_ref[...] = (acc + b_ref[...]).astype(o_ref.dtype)


def prepare_fc_params(W, b, *, d, k, seq_s, seq_c, out_pad=OUT_PAD,
                      param_dtype=jnp.float32):
    """One-time parameter transform (do NOT repeat per forward call).

    W: (out_size, (1+k)*d) nn.Linear weight, b: (out_size,) bias.
    Returns:
      Ws_pad: (seq_s*d, out_pad)   rows = WT[0:d] replicated seq_s times / seq_s
      Wc_pad: (k*seq_c*d, out_pad) each of the k d-row chunks replicated seq_c
                                   times / seq_c (mean folded into the MXU)
      b_pad : (1, out_pad)         bias zero-padded past out_size (kept f32)
    """
    out_size = W.shape[0]
    assert out_size <= out_pad
    WT = jnp.asarray(W, jnp.float32).T                      # ((1+k)*d, out_size)

    # S chunk: mean over seq_s folded in.
    Ws = jnp.tile(WT[:d] / seq_s, (seq_s, 1))               # (seq_s*d, out_size)

    # C chunks: for each of the k chunks, replicate its d rows seq_c times.
    WTc = WT[d:].reshape(k, 1, d, out_size) / seq_c
    Wc = jnp.broadcast_to(WTc, (k, seq_c, d, out_size)).reshape(
        k * seq_c * d, out_size)

    Ws_pad = jnp.zeros((seq_s * d, out_pad), jnp.float32).at[:, :out_size].set(Ws)
    Wc_pad = jnp.zeros((k * seq_c * d, out_pad), jnp.float32).at[:, :out_size].set(Wc)
    b_pad = jnp.zeros((1, out_pad), jnp.float32).at[0, :out_size].set(
        jnp.asarray(b, jnp.float32))
    return Ws_pad.astype(param_dtype), Wc_pad.astype(param_dtype), b_pad


def _pick_batch_block_and_vmem(B, row_in_bytes, weight_bytes, out_pad):
    """Generation-aware batch block + vmem_limit_bytes."""
    try:
        vmem_cap = int(pltpu.get_tpu_info().vmem_capacity_bytes)
    except Exception:
        vmem_cap = 64 << 20                       # conservative (v7x per-TC)
    small_vmem = vmem_cap < (100 << 20)           # v7x: 64 MiB/TC; v5e/v6e: 128 MiB

    bm_cap = 2048 if small_vmem else 4096
    budget = (10 << 20) if small_vmem else (14 << 20)   # bytes per input-buffer set

    if B <= 8:
        bm = B
    else:
        bm = min(bm_cap, B, max(8, budget // max(1, row_in_bytes)))
        bm = max(8, (bm // 8) * 8)
        if small_vmem and B >= 32:
            # Guarantee >=2 grid steps so v7x's two TensorCores both get work.
            half = max(8, (((B + 1) // 2) + 7) // 8 * 8)
            bm = min(bm, half)

    needed = (2 * bm * (row_in_bytes + out_pad * 4)   # double-buffered in/out
              + 2 * weight_bytes                      # weights + bias
              + (1 << 20))                            # headroom
    vmem_limit = int(min(max(needed * 1.4, 32 << 20), 0.6 * vmem_cap))
    return bm, vmem_limit


def fc_model_forward(S, C, Ws_pad, Wc_pad, b_pad, out_size, *, slice_output=True):
    """S: (B,1,seq_s,d), C: (B,k,seq_c,d); params from prepare_fc_params.

    slice_output=False returns the lane-dense (B, OUT_PAD) f32 slab (consumer
    can slice/fuse it), avoiding the extra padded-output pass in XLA.
    """
    B, _, seq_s, d = S.shape
    _, k, seq_c, _ = C.shape
    out_pad = Ws_pad.shape[-1]
    ks = seq_s * d
    kc = k * seq_c * d

    # Free, row-major-contiguous flattening -> 2-D lane-dense blocks.
    s2d = S.reshape(B, ks)
    c2d = C.reshape(B, kc)

    row_in_bytes = ks * s2d.dtype.itemsize + kc * c2d.dtype.itemsize
    weight_bytes = Ws_pad.nbytes + Wc_pad.nbytes + b_pad.nbytes
    bm, vmem_limit = _pick_batch_block_and_vmem(B, row_in_bytes, weight_bytes, out_pad)
    grid = (pl.cdiv(B, bm),)

    cost = pl.CostEstimate(
        flops=2 * B * (ks + kc) * out_pad,
        transcendentals=0,
        bytes_accessed=(B * row_in_bytes + weight_bytes + B * out_pad * 4),
    )

    out = pl.pallas_call(
        _fc_model_kernel,
        out_shape=jax.ShapeDtypeStruct((B, out_pad), jnp.float32),
        grid_spec=pltpu.PrefetchScalarGridSpec(
            num_scalar_prefetch=0,
            grid=grid,
            in_specs=[
                pl.BlockSpec((bm, ks), lambda i: (i, 0)),
                pl.BlockSpec((bm, kc), lambda i: (i, 0)),
                pl.BlockSpec((ks, out_pad), lambda i: (0, 0)),
                pl.BlockSpec((kc, out_pad), lambda i: (0, 0)),
                pl.BlockSpec((1, out_pad), lambda i: (0, 0)),
            ],
            out_specs=pl.BlockSpec((bm, out_pad), lambda i: (i, 0)),
        ),
        compiler_params=pltpu.CompilerParams(
            dimension_semantics=("parallel",),
            vmem_limit_bytes=vmem_limit,
        ),
        cost_estimate=cost,
    )(s2d, c2d, Ws_pad, Wc_pad, b_pad)

    if not slice_output:
        return out
    # Drop the zero lane-padding, then mirror PyTorch's final output.squeeze()
    # (drops the batch dim when B == 1, as in torch).
    return jnp.squeeze(out[:, :out_size])


def reference_forward(S, C, W, b):
    """Pure-JAX reference mirroring the PyTorch module (unpadded params)."""
    s = jnp.mean(S, axis=-2)[:, 0, :]                     # (B, d)
    c = jnp.mean(C, axis=-2)                              # (B, k, d)
    c = c.reshape(c.shape[0], c.shape[1] * c.shape[2])    # (B, k*d)
    x = jnp.concatenate([s, c], axis=-1)                  # (B, (1+k)*d)
    return jnp.squeeze(x @ W.T + b[None, :])


if __name__ == "__main__":
    # Small shapes consistent with the module: feature_size=d=32, k=2, out=6.
    B, k, seq, d, out_size = 2, 2, 8, 32, 6

    key = jax.random.PRNGKey(0)
    k_s, k_c, k_w, k_b = jax.random.split(key, 4)

    S = jax.random.normal(k_s, (B, 1, seq, d), dtype=jnp.float32)
    C = jax.random.normal(k_c, (B, k, seq, d), dtype=jnp.float32)

    # Deterministic nn.Linear-style init: U(-1/sqrt(in), 1/sqrt(in)).
    in_features = (1 + k) * d
    bound = 1.0 / jnp.sqrt(jnp.float32(in_features))
    W = jax.random.uniform(k_w, (out_size, in_features), jnp.float32, -bound, bound)
    b = jax.random.uniform(k_b, (out_size,), jnp.float32, -bound, bound)

    y_ref = reference_forward(S, C, W, b)

    # f32 path: one-time prep (mean folded into seq-replicated weights).
    Ws_pad, Wc_pad, b_pad = prepare_fc_params(W, b, d=d, k=k, seq_s=seq, seq_c=seq)
    y = jax.block_until_ready(fc_model_forward(S, C, Ws_pad, Wc_pad, b_pad, out_size))
    assert y.shape == (B, out_size), y.shape
    assert jnp.allclose(y, y_ref, atol=1e-4, rtol=1e-4), (y, y_ref)

    # bf16 streaming path (halved HBM input bytes; f32 MXU accumulation).
    Ws_bf, Wc_bf, b_bf = prepare_fc_params(W, b, d=d, k=k, seq_s=seq, seq_c=seq,
                                           param_dtype=jnp.bfloat16)
    y_bf = jax.block_until_ready(
        fc_model_forward(S.astype(jnp.bfloat16), C.astype(jnp.bfloat16),
                         Ws_bf, Wc_bf, b_bf, out_size))
    assert jnp.allclose(y_bf, y_ref, atol=5e-2, rtol=5e-2), (y_bf, y_ref)

    print("KERNEL_OK")
</pallas_src>

<mosaic_0001>
module attributes {stable_mosaic.version = 11 : i64} {
  func.func @_fc_model_kernel(%arg0: i32, %arg1: memref<2x256xf32, #tpu.memory_space<vmem>>, %arg2: memref<2x512xf32, #tpu.memory_space<vmem>>, %arg3: memref<256x128xf32, #tpu.memory_space<vmem>>, %arg4: memref<512x128xf32, #tpu.memory_space<vmem>>, %arg5: memref<1x128xf32, #tpu.memory_space<vmem>>, %arg6: memref<2x128xf32, #tpu.memory_space<vmem>>) attributes {dimension_semantics = [#tpu.dimension_semantics<parallel>], iteration_bounds = array<i64: 1>, scalar_prefetch = 0 : i64, scratch_operands = 0 : i64, tpu.core_type = #tpu.core_type<tc>, window_params = [{transform_indices = @transform_0, window_bounds = array<i64: 2, 256>}, {transform_indices = @transform_1, window_bounds = array<i64: 2, 512>}, {pipeline_mode = #tpu.pipeline_mode<synchronous>, transform_indices = @transform_2, window_bounds = array<i64: 256, 128>}, {pipeline_mode = #tpu.pipeline_mode<synchronous>, transform_indices = @transform_3, window_bounds = array<i64: 512, 128>}, {pipeline_mode = #tpu.pipeline_mode<synchronous>, transform_indices = @transform_4, window_bounds = array<i64: 1, 128>}, {transform_indices = @transform_5, window_bounds = array<i64: 2, 128>}]} {
    %c0 = arith.constant 0 : index
    %c0_0 = arith.constant 0 : index
    %0 = vector.load %arg1[%c0, %c0_0] : memref<2x256xf32, #tpu.memory_space<vmem>>, vector<2x256xf32>
    %c0_1 = arith.constant 0 : index
    %c0_2 = arith.constant 0 : index
    %1 = vector.load %arg3[%c0_1, %c0_2] : memref<256x128xf32, #tpu.memory_space<vmem>>, vector<256x128xf32>
    %cst = arith.constant dense<0.000000e+00> : vector<2x128xf32>
    %2 = tpu.matmul %0, %1, %cst {dimension_numbers = #tpu.dot_dimension_numbers<[1], [0], [0], [1], [0, 0, 1, 1], [], []>} : vector<2x256xf32>, vector<256x128xf32>, vector<2x128xf32> -> vector<2x128xf32>
    %c0_3 = arith.constant 0 : index
    %c0_4 = arith.constant 0 : index
    %3 = vector.load %arg2[%c0_3, %c0_4] : memref<2x512xf32, #tpu.memory_space<vmem>>, vector<2x512xf32>
    %c0_5 = arith.constant 0 : index
    %c0_6 = arith.constant 0 : index
    %4 = vector.load %arg4[%c0_5, %c0_6] : memref<512x128xf32, #tpu.memory_space<vmem>>, vector<512x128xf32>
    %cst_7 = arith.constant dense<0.000000e+00> : vector<2x128xf32>
    %5 = tpu.matmul %3, %4, %cst_7 {dimension_numbers = #tpu.dot_dimension_numbers<[1], [0], [0], [1], [0, 0, 1, 1], [], []>} : vector<2x512xf32>, vector<512x128xf32>, vector<2x128xf32> -> vector<2x128xf32>
    %6 = arith.addf %2, %5 : vector<2x128xf32>
    %c0_8 = arith.constant 0 : index
    %c0_9 = arith.constant 0 : index
    %7 = vector.load %arg5[%c0_8, %c0_9] : memref<1x128xf32, #tpu.memory_space<vmem>>, vector<1x128xf32>
    %8 = vector.broadcast %7 : vector<1x128xf32> to vector<2x128xf32>
    %9 = arith.addf %6, %8 : vector<2x128xf32>
    %c0_10 = arith.constant 0 : index
    %c0_11 = arith.constant 0 : index
    %10 = vector.load %arg6[%c0_10, %c0_11] : memref<2x128xf32, #tpu.memory_space<vmem>>, vector<2x128xf32>
    tpu.vector_store %arg6[%c0_10, %c0_11], %9 {strides = array<i32>} : memref<2x128xf32, #tpu.memory_space<vmem>>, vector<2x128xf32>,
    return
  }
  func.func @transform_0(%arg0: i32) -> (i32, i32) {
    %c0_i32 = arith.constant 0 : i32
    %c0_i32_0 = arith.constant 0 : i32
    return %arg0, %c0_i32 : i32, i32
  }
  func.func @transform_1(%arg0: i32) -> (i32, i32) {
    %c0_i32 = arith.constant 0 : i32
    %c0_i32_0 = arith.constant 0 : i32
    return %arg0, %c0_i32 : i32, i32
  }
  func.func @transform_2(%arg0: i32) -> (i32, i32) {
    %c0_i32 = arith.constant 0 : i32
    %c0_i32_0 = arith.constant 0 : i32
    %c0_i32_1 = arith.constant 0 : i32
    return %c0_i32, %c0_i32_0 : i32, i32
  }
  func.func @transform_3(%arg0: i32) -> (i32, i32) {
    %c0_i32 = arith.constant 0 : i32
    %c0_i32_0 = arith.constant 0 : i32
    %c0_i32_1 = arith.constant 0 : i32
    return %c0_i32, %c0_i32_0 : i32, i32
  }
  func.func @transform_4(%arg0: i32) -> (i32, i32) {
    %c0_i32 = arith.constant 0 : i32
    %c0_i32_0 = arith.constant 0 : i32
    %c0_i32_1 = arith.constant 0 : i32
    return %c0_i32, %c0_i32_0 : i32, i32
  }
  func.func @transform_5(%arg0: i32) -> (i32, i32) {
    %c0_i32 = arith.constant 0 : i32
    %c0_i32_0 = arith.constant 0 : i32
    return %arg0, %c0_i32 : i32, i32
  }
}

</mosaic_0001>

<llo_original>
// kernel: tpu_custom_call.1
$region0: #{tpu_custom_call.1}
  #allocation0 [shape = 'u32[]', space=smem, size = 0x4, offset = 0x4, fixed_abs, tag = 'smem constant byte address 0x4 - core index']
  #allocation1 [shape = 'u32[144,128]{1,0:T(1,128)}', space=vmem, size = 0x12000, scoped, tag = 'internal scratch']
  %s0 = inlined_call_operand.hbm [shape: f32[2,256], index: 0, kind: input, shape index: {}]
  %s1 = inlined_call_operand.hbm [shape: f32[2,512], index: 1, kind: input, shape index: {}]
  %s2 = inlined_call_operand.hbm [shape: f32[256,128], index: 2, kind: input, shape index: {}]
  %s3 = inlined_call_operand.hbm [shape: f32[512,128], index: 3, kind: input, shape index: {}]
  %s4 = inlined_call_operand.vmem [shape: f32[1,128], index: 4, kind: input, shape index: {}]
  %s5 = inlined_call_operand.hbm [shape: f32[2,128], index: 5, kind: output, shape index: {}]
  %s6 = sld [smem:[#allocation0]]
  $region46: #{tpu_custom_call.1} parent=0
    _
  %s8 = ssub.s32 1, %s6
  %s9 = scalar_select 0, %s8, %s6
  $region1: #{tpu_custom_call.1} parent=0
    #allocation2 [shape = 'u8[2048]{0}', space=vmem, size = 0x800, scoped, tag = 'input window, operand 0, single buffered']
    #allocation3 [shape = 's32[1]{0}', space=sflag, size = 0x4, scoped, tag = 'scoped memory for tpu_custom_call.1']
    #allocation4 [shape = 's32[1]{0}', space=sflag, size = 0x4, scoped, tag = 'scoped memory for tpu_custom_call.1']
    #allocation5 [shape = 'u8[4096]{0}', space=vmem, size = 0x1000, scoped, tag = 'input window, operand 1, single buffered']
    #allocation6 [shape = 's32[1]{0}', space=sflag, size = 0x4, scoped, tag = 'scoped memory for tpu_custom_call.1']
    #allocation7 [shape = 'u8[131072]{0}', space=vmem, size = 0x20000, scoped, tag = 'input window, operand 2, single buffered']
    #allocation8 [shape = 'u8[262144]{0}', space=vmem, size = 0x40000, scoped, tag = 'input window, operand 3, single buffered']
    #allocation9 [shape = 's32[1]{0}', space=sflag, size = 0x4, scoped, tag = 'scoped memory for tpu_custom_call.1']
    #allocation10 [shape = 'u8[1024]{0}', space=vmem, size = 0x400, scoped, tag = 'output window, operand 0, single buffered']
    %10 = vsyncpa [#allocation3], 0
    %11 = vsyncpa [#allocation6], 0
    %12 = vsyncpa [#allocation9], 0
    %13 = vsyncpa [#allocation4], 0
    // Predicated region
    $region2: #{tpu_custom_call.1} parent=1 // pred_check
      _
    $region3: #{tpu_custom_call.1} parent=1 // pred_check_branch
      %15 = sbr.rel (0) target = $region5
    $region4: #{tpu_custom_call.1} parent=1 // pred_region
      %s17 = ssub.s32 64, 64
      %18 = vsyncadd [#allocation3], %s17
      %s20 = sshll.u32 [#allocation2], 4
      %s21 = int_to_ptr.vmem [resolvable:$true] %s20
      %23 = dma.hbm_to_vmem [thread:$0]  %s0, 64, %s21, [#allocation3]
    $region5: #{tpu_custom_call.1} parent=1 // pred_fallthru
      _
    // Predicated region
    $region6: #{tpu_custom_call.1} parent=1 // pred_check
      _
    $region7: #{tpu_custom_call.1} parent=1 // pred_check_branch
      %25 = sbr.rel (0) target = $region9
    $region8: #{tpu_custom_call.1} parent=1 // pred_region
      %s27 = ssub.s32 128, 128
      %28 = vsyncadd [#allocation6], %s27
      %s30 = sshll.u32 [#allocation5], 4
      %s31 = int_to_ptr.vmem [resolvable:$true] %s30
      %33 = dma.hbm_to_vmem [thread:$0]  %s1, 128, %s31, [#allocation6]
    $region9: #{tpu_custom_call.1} parent=1 // pred_fallthru
      _
    // Predicated region
    $region10: #{tpu_custom_call.1} parent=1 // pred_check
      _
    $region11: #{tpu_custom_call.1} parent=1 // pred_check_branch
      %35 = sbr.rel (0) target = $region13
    $region12: #{tpu_custom_call.1} parent=1 // pred_region
      %s37 = ssub.s32 4096, 4096
      %38 = vsyncadd [#allocation6], %s37
      %s39 = sshll.u32 [#allocation7], 4
      %s40 = int_to_ptr.vmem [resolvable:$true] %s39
      %45 = dma.hbm_to_vmem [thread:$0]  %s2, 4096, %s40, [#allocation6], 128, 128, 8
    $region13: #{tpu_custom_call.1} parent=1 // pred_fallthru
      _
    // Predicated region
    $region14: #{tpu_custom_call.1} parent=1 // pred_check
      _
    $region15: #{tpu_custom_call.1} parent=1 // pred_check_branch
      %47 = sbr.rel (0) target = $region17
    $region16: #{tpu_custom_call.1} parent=1 // pred_region
      %s49 = ssub.s32 8192, 8192
      %50 = vsyncadd [#allocation9], %s49
      %s51 = sshll.u32 [#allocation8], 4
      %s52 = int_to_ptr.vmem [resolvable:$true] %s51
      %57 = dma.hbm_to_vmem [thread:$0]  %s3, 8192, %s52, [#allocation9], 128, 128, 8
    $region17: #{tpu_custom_call.1} parent=1 // pred_fallthru
      _
    // Predicated region
    $region18: #{tpu_custom_call.1} parent=1 // pred_check
      _
    $region19: #{tpu_custom_call.1} parent=1 // pred_check_branch
      %59 = sbr.rel (0) target = $region21
    $region20: #{tpu_custom_call.1} parent=1 // pred_region
      _
    $region21: #{tpu_custom_call.1} parent=1 // pred_fallthru
      _
    // Predicated region
    $region22: #{tpu_custom_call.1} parent=1 // pred_check
      _
    $region23: #{tpu_custom_call.1} parent=1 // pred_check_branch
      %61 = sbr.rel (0) target = $region25
    $region24: #{tpu_custom_call.1} parent=1 // pred_region
      %62 = dma.done [#allocation3], 64
    $region25: #{tpu_custom_call.1} parent=1 // pred_fallthru
      _
    // Predicated region
    $region26: #{tpu_custom_call.1} parent=1 // pred_check
      _
    $region27: #{tpu_custom_call.1} parent=1 // pred_check_branch
      %64 = sbr.rel (0) target = $region29
    $region28: #{tpu_custom_call.1} parent=1 // pred_region
      %65 = dma.done [#allocation6], 128
    $region29: #{tpu_custom_call.1} parent=1 // pred_fallthru
      _
    // Predicated region
    $region30: #{tpu_custom_call.1} parent=1 // pred_check
      _
    $region31: #{tpu_custom_call.1} parent=1 // pred_check_branch
      %67 = sbr.rel (0) target = $region33
    $region32: #{tpu_custom_call.1} parent=1 // pred_region
      %68 = dma.done [#allocation6], 4096
    $region33: #{tpu_custom_call.1} parent=1 // pred_fallthru
      _
    // Predicated region
    $region34: #{tpu_custom_call.1} parent=1 // pred_check
      _
    $region35: #{tpu_custom_call.1} parent=1 // pred_check_branch
      %70 = sbr.rel (0) target = $region37
    $region36: #{tpu_custom_call.1} parent=1 // pred_region
      %71 = dma.done [#allocation9], 8192
    $region37: #{tpu_custom_call.1} parent=1 // pred_fallthru
      _
    %v72 = vld [vmem:[#allocation2] sm:$0xf]
    %v73 = vld [vmem:[#allocation7] sm:$0xff]
    %v74 = vld [vmem:[#allocation7 + $0x8] sm:$0xff]
    %v75 = vld [vmem:[#allocation7 + $0x10] sm:$0xff]
    %v76 = vld [vmem:[#allocation7 + $0x18] sm:$0xff]
    %v77 = vld [vmem:[#allocation7 + $0x20] sm:$0xff]
    %v78 = vld [vmem:[#allocation7 + $0x28] sm:$0xff]
    %v79 = vld [vmem:[#allocation7 + $0x30] sm:$0xff]
    %v80 = vld [vmem:[#allocation7 + $0x38] sm:$0xff]
    %v81 = vld [vmem:[#allocation7 + $0x40] sm:$0xff]
    %v82 = vld [vmem:[#allocation7 + $0x48] sm:$0xff]
    %v83 = vld [vmem:[#allocation7 + $0x50] sm:$0xff]
    %v84 = vld [vmem:[#allocation7 + $0x58] sm:$0xff]
    %v85 = vld [vmem:[#allocation7 + $0x60] sm:$0xff]
    %v86 = vld [vmem:[#allocation7 + $0x68] sm:$0xff]
    %v87 = vld [vmem:[#allocation7 + $0x70] sm:$0xff]
    %v88 = vld [vmem:[#allocation7 + $0x78] sm:$0xff]
    %v89 = vld [vmem:[#allocation7 + $0x80] sm:$0xff]
    %v90 = vld [vmem:[#allocation7 + $0x88] sm:$0xff]
    %v91 = vld [vmem:[#allocation7 + $0x90] sm:$0xff]
    %v92 = vld [vmem:[#allocation7 + $0x98] sm:$0xff]
    %v93 = vld [vmem:[#allocation7 + $0xa0] sm:$0xff]
    %v94 = vld [vmem:[#allocation7 + $0xa8] sm:$0xff]
    %v95 = vld [vmem:[#allocation7 + $0xb0] sm:$0xff]
    %v96 = vld [vmem:[#allocation7 + $0xb8] sm:$0xff]
    %v97 = vld [vmem:[#allocation7 + $0xc0] sm:$0xff]
    %v98 = vld [vmem:[#allocation7 + $0xc8] sm:$0xff]
    %v99 = vld [vmem:[#allocation7 + $0xd0] sm:$0xff]
    %v100 = vld [vmem:[#allocation7 + $0xd8] sm:$0xff]
    %v101 = vld [vmem:[#allocation7 + $0xe0] sm:$0xff]
    %v102 = vld [vmem:[#allocation7 + $0xe8] sm:$0xff]
    %v103 = vld [vmem:[#allocation7 + $0xf0] sm:$0xff]
    %v104 = vld [vmem:[#allocation7 + $0xf8] sm:$0xff]
    %v105 = vld [vmem:[#allocation5] sm:$0xff]
    %v106 = vld [vmem:[#allocation8] sm:$0xff]
    %v107 = vld [vmem:[#allocation8 + $0x8] sm:$0xff]
    %v108 = vld [vmem:[#allocation8 + $0x10] sm:$0xff]
    %v109 = vld [vmem:[#allocation8 + $0x18] sm:$0xff]
    %v110 = vld [vmem:[#allocation8 + $0x20] sm:$0xff]
    %v111 = vld [vmem:[#allocation8 + $0x28] sm:$0xff]
    %v112 = vld [vmem:[#allocation8 + $0x30] sm:$0xff]
    %v113 = vld [vmem:[#allocation8 + $0x38] sm:$0xff]
    %v114 = vld [vmem:[#allocation8 + $0x40] sm:$0xff]
    %v115 = vld [vmem:[#allocation8 + $0x48] sm:$0xff]
    %v116 = vld [vmem:[#allocation8 + $0x50] sm:$0xff]
    %v117 = vld [vmem:[#allocation8 + $0x58] sm:$0xff]
    %v118 = vld [vmem:[#allocation8 + $0x60] sm:$0xff]
    %v119 = vld [vmem:[#allocation8 + $0x68] sm:$0xff]
    %v120 = vld [vmem:[#allocation8 + $0x70] sm:$0xff]
    %v121 = vld [vmem:[#allocation8 + $0x78] sm:$0xff]
    %v122 = vld [vmem:[#allocation8 + $0x80] sm:$0xff]
    %v123 = vld [vmem:[#allocation8 + $0x88] sm:$0xff]
    %v124 = vld [vmem:[#allocation8 + $0x90] sm:$0xff]
    %v125 = vld [vmem:[#allocation8 + $0x98] sm:$0xff]
    %v126 = vld [vmem:[#allocation8 + $0xa0] sm:$0xff]
    %v127 = vld [vmem:[#allocation8 + $0xa8] sm:$0xff]
    %v128 = vld [vmem:[#allocation8 + $0xb0] sm:$0xff]
    %v129 = vld [vmem:[#allocation8 + $0xb8] sm:$0xff]
    %v130 = vld [vmem:[#allocation8 + $0xc0] sm:$0xff]
    %v131 = vld [vmem:[#allocation8 + $0xc8] sm:$0xff]
    %v132 = vld [vmem:[#allocation8 + $0xd0] sm:$0xff]
    %v133 = vld [vmem:[#allocation8 + $0xd8] sm:$0xff]
    %v134 = vld [vmem:[#allocation8 + $0xe0] sm:$0xff]
    %v135 = vld [vmem:[#allocation8 + $0xe8] sm:$0xff]
    %v136 = vld [vmem:[#allocation8 + $0xf0] sm:$0xff]
    %v137 = vld [vmem:[#allocation8 + $0xf8] sm:$0xff]
    %v138 = vld [vmem:[#allocation8 + $0x100] sm:$0xff]
    %v139 = vld [vmem:[#allocation8 + $0x108] sm:$0xff]
    %v140 = vld [vmem:[#allocation8 + $0x110] sm:$0xff]
    %v141 = vld [vmem:[#allocation8 + $0x118] sm:$0xff]
    %v142 = vld [vmem:[#allocation8 + $0x120] sm:$0xff]
    %v143 = vld [vmem:[#allocation8 + $0x128] sm:$0xff]
    %v144 = vld [vmem:[#allocation8 + $0x130] sm:$0xff]
    %v145 = vld [vmem:[#allocation8 + $0x138] sm:$0xff]
    %v146 = vld [vmem:[#allocation8 + $0x140] sm:$0xff]
    %v147 = vld [vmem:[#allocation8 + $0x148] sm:$0xff]
    %v148 = vld [vmem:[#allocation8 + $0x150] sm:$0xff]
    %v149 = vld [vmem:[#allocation8 + $0x158] sm:$0xff]
    %v150 = vld [vmem:[#allocation8 + $0x160] sm:$0xff]
    %v151 = vld [vmem:[#allocation8 + $0x168] sm:$0xff]
    %v152 = vld [vmem:[#allocation8 + $0x170] sm:$0xff]
    %v153 = vld [vmem:[#allocation8 + $0x178] sm:$0xff]
    %v154 = vld [vmem:[#allocation8 + $0x180] sm:$0xff]
    %v155 = vld [vmem:[#allocation8 + $0x188] sm:$0xff]
    %v156 = vld [vmem:[#allocation8 + $0x190] sm:$0xff]
    %v157 = vld [vmem:[#allocation8 + $0x198] sm:$0xff]
    %v158 = vld [vmem:[#allocation8 + $0x1a0] sm:$0xff]
    %v159 = vld [vmem:[#allocation8 + $0x1a8] sm:$0xff]
    %v160 = vld [vmem:[#allocation8 + $0x1b0] sm:$0xff]
    %v161 = vld [vmem:[#allocation8 + $0x1b8] sm:$0xff]
    %v162 = vld [vmem:[#allocation8 + $0x1c0] sm:$0xff]
    %v163 = vld [vmem:[#allocation8 + $0x1c8] sm:$0xff]
    %v164 = vld [vmem:[#allocation8 + $0x1d0] sm:$0xff]
    %v165 = vld [vmem:[#allocation8 + $0x1d8] sm:$0xff]
    %v166 = vld [vmem:[#allocation8 + $0x1e0] sm:$0xff]
    %v167 = vld [vmem:[#allocation8 + $0x1e8] sm:$0xff]
    %v168 = vld [vmem:[#allocation8 + $0x1f0] sm:$0xff]
    %v169 = vld [vmem:[#allocation8 + $0x1f8] sm:$0xff]
    %v171 = vcombine.high %v105, %v105
    %v173 = vunpack.c.l.s4 1983009808
    %v174 = vunpack.c.0.s8 %v173
    %v175 = vlaneseq
    %v176 = vshrl.u32 %v175, 7
    %v177 = vsub.s32 %v174, %v176
    %v178 = vrot.slane %v105, %v177
    %v180 = vunpack.c.l.s4 1983009808
    %v181 = vunpack.c.0.s8 %v180
    %v182 = vlaneseq
    %v183 = vshrl.u32 %v182, 7
    %v184 = vsub.s32 %v181, %v183
    %v185 = vrot.slane %v171, %v184
    %v186 = vcombine.high %v178, %v178
    %v187 = vcombine.high %v185, %v185
    %192 = vmatprep.subr.mxu0 0.0
    %193 = vmatpush1.msra.mxu0 %v106
    %194 = vmatprep.subr.mxu0 0.0
    %195 = vmatpush1.msra.mxu0 %v107
    %196 = vmatprep.subr.mxu0 0.0
    %197 = vmatpush1.msra.mxu0 %v108
    %198 = vmatprep.subr.mxu0 0.0
    %199 = vmatpush1.msra.mxu0 %v109
    %200 = vmatprep.subr.mxu0 0.0
    %201 = vmatpush1.msra.mxu0 %v110
    %202 = vmatprep.subr.mxu0 0.0
    %203 = vmatpush1.msra.mxu0 %v111
    %204 = vmatprep.subr.mxu0 0.0
    %205 = vmatpush1.msra.mxu0 %v112
    %206 = vmatprep.subr.mxu0 0.0
    %207 = vmatpush1.msra.mxu0 %v113
    %208 = vmatprep.subr.mxu0 0.0
    %209 = vmatpush1.msra.mxu0 %v114
    %210 = vmatprep.subr.mxu0 0.0
    %211 = vmatpush1.msra.mxu0 %v115
    %212 = vmatprep.subr.mxu0 0.0
    %213 = vmatpush1.msra.mxu0 %v116
    %214 = vmatprep.subr.mxu0 0.0
    %215 = vmatpush1.msra.mxu0 %v117
    %216 = vmatprep.subr.mxu0 0.0
    %217 = vmatpush1.msra.mxu0 %v118
    %218 = vmatprep.subr.mxu0 0.0
    %219 = vmatpush1.msra.mxu0 %v119
    %220 = vmatprep.subr.mxu0 0.0
    %221 = vmatpush1.msra.mxu0 %v120
    %222 = vmatprep.subr.mxu0 0.0
    %223 = vmatpush1.msra.mxu0 %v121
    %224 = vmatprep.subr.mxu0 0.0
    %225 = vmatpush1.msra.mxu0 %v122
    %226 = vmatprep.subr.mxu0 0.0
    %227 = vmatpush1.msra.mxu0 %v123
    %228 = vmatprep.subr.mxu0 0.0
    %229 = vmatpush1.msra.mxu0 %v124
    %230 = vmatprep.subr.mxu0 0.0
    %231 = vmatpush1.msra.mxu0 %v125
    %232 = vmatprep.subr.mxu0 0.0
    %233 = vmatpush1.msra.mxu0 %v126
    %234 = vmatprep.subr.mxu0 0.0
    %235 = vmatpush1.msra.mxu0 %v127
    %236 = vmatprep.subr.mxu0 0.0
    %237 = vmatpush1.msra.mxu0 %v128
    %238 = vmatprep.subr.mxu0 0.0
    %239 = vmatpush1.msra.mxu0 %v129
    %240 = vmatprep.subr.mxu0 0.0
    %241 = vmatpush1.msra.mxu0 %v130
    %242 = vmatprep.subr.mxu0 0.0
    %243 = vmatpush1.msra.mxu0 %v131
    %244 = vmatprep.subr.mxu0 0.0
    %245 = vmatpush1.msra.mxu0 %v132
    %246 = vmatprep.subr.mxu0 0.0
    %247 = vmatpush1.msra.mxu0 %v133
    %248 = vmatprep.subr.mxu0 0.0
    %249 = vmatpush1.msra.mxu0 %v134
    %250 = vmatprep.subr.mxu0 0.0
    %251 = vmatpush1.msra.mxu0 %v135
    %252 = vmatprep.subr.mxu0 0.0
    %253 = vmatpush1.msra.mxu0 %v136
    %254 = vmatprep.subr.mxu0 0.0
    %255 = vmatpush1.msra.mxu0 %v137
    %256 = vmatprep.mubr.f32.mxu0 %v186
    %257 = vmatmul.mubr.f32.gmra.mrb[0].mxu0 %v178
    %v258 = vpop.f32.mrb[0].mxu0
    %v259 = vadd.f32 0.0, %v258
    %v260 = vpop.f32.mrb[0].mxu0
    %261 = vdwg.mxu0
    %262 = vmatprep.subr.mxu0 0.0
    %263 = vmatpush1.msra.mxu0 %v138
    %264 = vmatprep.subr.mxu0 0.0
    %265 = vmatpush1.msra.mxu0 %v139
    %266 = vmatprep.subr.mxu0 0.0
    %267 = vmatpush1.msra.mxu0 %v140
    %268 = vmatprep.subr.mxu0 0.0
    %269 = vmatpush1.msra.mxu0 %v141
    %270 = vmatprep.subr.mxu0 0.0
    %271 = vmatpush1.msra.mxu0 %v142
    %272 = vmatprep.subr.mxu0 0.0
    %273 = vmatpush1.msra.mxu0 %v143
    %274 = vmatprep.subr.mxu0 0.0
    %275 = vmatpush1.msra.mxu0 %v144
    %276 = vmatprep.subr.mxu0 0.0
    %277 = vmatpush1.msra.mxu0 %v145
    %278 = vmatprep.subr.mxu0 0.0
    %279 = vmatpush1.msra.mxu0 %v146
    %280 = vmatprep.subr.mxu0 0.0
    %281 = vmatpush1.msra.mxu0 %v147
    %282 = vmatprep.subr.mxu0 0.0
    %283 = vmatpush1.msra.mxu0 %v148
    %284 = vmatprep.subr.mxu0 0.0
    %285 = vmatpush1.msra.mxu0 %v149
    %286 = vmatprep.subr.mxu0 0.0
    %287 = vmatpush1.msra.mxu0 %v150
    %288 = vmatprep.subr.mxu0 0.0
    %289 = vmatpush1.msra.mxu0 %v151
    %290 = vmatprep.subr.mxu0 0.0
    %291 = vmatpush1.msra.mxu0 %v152
    %292 = vmatprep.subr.mxu0 0.0
    %293 = vmatpush1.msra.mxu0 %v153
    %294 = vmatprep.subr.mxu0 0.0
    %295 = vmatpush1.msra.mxu0 %v154
    %296 = vmatprep.subr.mxu0 0.0
    %297 = vmatpush1.msra.mxu0 %v155
    %298 = vmatprep.subr.mxu0 0.0
    %299 = vmatpush1.msra.mxu0 %v156
    %300 = vmatprep.subr.mxu0 0.0
    %301 = vmatpush1.msra.mxu0 %v157
    %302 = vmatprep.subr.mxu0 0.0
    %303 = vmatpush1.msra.mxu0 %v158
    %304 = vmatprep.subr.mxu0 0.0
    %305 = vmatpush1.msra.mxu0 %v159
    %306 = vmatprep.subr.mxu0 0.0
    %307 = vmatpush1.msra.mxu0 %v160
    %308 = vmatprep.subr.mxu0 0.0
    %309 = vmatpush1.msra.mxu0 %v161
    %310 = vmatprep.subr.mxu0 0.0
    %311 = vmatpush1.msra.mxu0 %v162
    %312 = vmatprep.subr.mxu0 0.0
    %313 = vmatpush1.msra.mxu0 %v163
    %314 = vmatprep.subr.mxu0 0.0
    %315 = vmatpush1.msra.mxu0 %v164
    %316 = vmatprep.subr.mxu0 0.0
    %317 = vmatpush1.msra.mxu0 %v165
    %318 = vmatprep.subr.mxu0 0.0
    %319 = vmatpush1.msra.mxu0 %v166
    %320 = vmatprep.subr.mxu0 0.0
    %321 = vmatpush1.msra.mxu0 %v167
    %322 = vmatprep.subr.mxu0 0.0
    %323 = vmatpush1.msra.mxu0 %v168
    %324 = vmatprep.subr.mxu0 0.0
    %325 = vmatpush1.msra.mxu0 %v169
    %326 = vmatprep.mubr.f32.mxu0 %v187
    %327 = vmatmul.mubr.f32.gmra.mrb[0].mxu0 %v185
    %v328 = vpop.f32.mrb[0].mxu0
    %v329 = vadd.f32 %v259, %v328
    %v330 = vpop.f32.mrb[0].mxu0
    %331 = vdwg.mxu0
    %v334 = vunpack.c.l.s4 1983009808
    %v335 = vunpack.c.0.s8 %v334
    %v336 = vlaneseq
    %v337 = vshrl.u32 %v336, 7
    %v338 = vsub.s32 %v335, %v337
    %v339 = vrot.slane %v72, %v338
    %v340 = vcombine.high %v339, %v339
    %343 = vmatprep.subr.mxu0 0.0
    %344 = vmatpush1.msra.mxu0 %v73
    %345 = vmatprep.subr.mxu0 0.0
    %346 = vmatpush1.msra.mxu0 %v74
    %347 = vmatprep.subr.mxu0 0.0
    %348 = vmatpush1.msra.mxu0 %v75
    %349 = vmatprep.subr.mxu0 0.0
    %350 = vmatpush1.msra.mxu0 %v76
    %351 = vmatprep.subr.mxu0 0.0
    %352 = vmatpush1.msra.mxu0 %v77
    %353 = vmatprep.subr.mxu0 0.0
    %354 = vmatpush1.msra.mxu0 %v78
    %355 = vmatprep.subr.mxu0 0.0
    %356 = vmatpush1.msra.mxu0 %v79
    %357 = vmatprep.subr.mxu0 0.0
    %358 = vmatpush1.msra.mxu0 %v80
    %359 = vmatprep.subr.mxu0 0.0
    %360 = vmatpush1.msra.mxu0 %v81
    %361 = vmatprep.subr.mxu0 0.0
    %362 = vmatpush1.msra.mxu0 %v82
    %363 = vmatprep.subr.mxu0 0.0
    %364 = vmatpush1.msra.mxu0 %v83
    %365 = vmatprep.subr.mxu0 0.0
    %366 = vmatpush1.msra.mxu0 %v84
    %367 = vmatprep.subr.mxu0 0.0
    %368 = vmatpush1.msra.mxu0 %v85
    %369 = vmatprep.subr.mxu0 0.0
    %370 = vmatpush1.msra.mxu0 %v86
    %371 = vmatprep.subr.mxu0 0.0
    %372 = vmatpush1.msra.mxu0 %v87
    %373 = vmatprep.subr.mxu0 0.0
    %374 = vmatpush1.msra.mxu0 %v88
    %375 = vmatprep.subr.mxu0 0.0
    %376 = vmatpush1.msra.mxu0 %v89
    %377 = vmatprep.subr.mxu0 0.0
    %378 = vmatpush1.msra.mxu0 %v90
    %379 = vmatprep.subr.mxu0 0.0
    %380 = vmatpush1.msra.mxu0 %v91
    %381 = vmatprep.subr.mxu0 0.0
    %382 = vmatpush1.msra.mxu0 %v92
    %383 = vmatprep.subr.mxu0 0.0
    %384 = vmatpush1.msra.mxu0 %v93
    %385 = vmatprep.subr.mxu0 0.0
    %386 = vmatpush1.msra.mxu0 %v94
    %387 = vmatprep.subr.mxu0 0.0
    %388 = vmatpush1.msra.mxu0 %v95
    %389 = vmatprep.subr.mxu0 0.0
    %390 = vmatpush1.msra.mxu0 %v96
    %391 = vmatprep.subr.mxu0 0.0
    %392 = vmatpush1.msra.mxu0 %v97
    %393 = vmatprep.subr.mxu0 0.0
    %394 = vmatpush1.msra.mxu0 %v98
    %395 = vmatprep.subr.mxu0 0.0
    %396 = vmatpush1.msra.mxu0 %v99
    %397 = vmatprep.subr.mxu0 0.0
    %398 = vmatpush1.msra.mxu0 %v100
    %399 = vmatprep.subr.mxu0 0.0
    %400 = vmatpush1.msra.mxu0 %v101
    %401 = vmatprep.subr.mxu0 0.0
    %402 = vmatpush1.msra.mxu0 %v102
    %403 = vmatprep.subr.mxu0 0.0
    %404 = vmatpush1.msra.mxu0 %v103
    %405 = vmatprep.subr.mxu0 0.0
    %406 = vmatpush1.msra.mxu0 %v104
    %407 = vmatprep.mubr.f32.mxu0 %v340
    %408 = vmatmul.mubr.f32.gmra.mrb[0].mxu0 %v339
    %v409 = vpop.f32.mrb[0].mxu0
    %v410 = vadd.f32 %v329, %v409
    %v411 = vpop.f32.mrb[0].mxu0
    %412 = vdwg.mxu0
    %v413 = vld [vmem:[%s4] sm:$0x1]
    %v415 = vlaneseq
    %v416 = vshrl.u32 %v415, 7
    %v417 = vsub.s32 0, %v416
    %v418 = vrot.slane %v413, %v417
    %v420 = vadd.f32 %v410, %v418
    %421 = vst [vmem:[#allocation10] sm:$0x3] %v420
    // Predicated region
    $region38: #{tpu_custom_call.1} parent=1 // pred_check
      _
    $region39: #{tpu_custom_call.1} parent=1 // pred_check_branch
      %423 = sbr.rel (0) target = $region41
    $region40: #{tpu_custom_call.1} parent=1 // pred_region
      %s425 = ssub.s32 32, 32
      %426 = vsyncadd [#allocation4], %s425
      %s428 = sshll.u32 [#allocation10], 4
      %s429 = int_to_ptr.vmem [resolvable:$true] %s428
      %431 = dma.vmem_to_hbm [thread:$0]  %s429, 32, %s5, [#allocation4]
    $region41: #{tpu_custom_call.1} parent=1 // pred_fallthru
      _
    // Predicated region
    $region42: #{tpu_custom_call.1} parent=1 // pred_check
      _
    $region43: #{tpu_custom_call.1} parent=1 // pred_check_branch
      %433 = sbr.rel (0) target = $region45
    $region44: #{tpu_custom_call.1} parent=1 // pred_region
      %434 = dma.done [#allocation4], 32
    $region45: #{tpu_custom_call.1} parent=1 // pred_fallthru
      _
    %435 = vsyncpa [#allocation3], 1
    %436 = vsyncpa [#allocation6], 1
    %437 = vsyncpa [#allocation9], 1
    %438 = vsyncpa [#allocation4], 1

</llo_original>
